<compile_context>
chip_gen: v7x
topology: tpu7x:2x2x1
jax: 0.10.0
libtpu: 0.0.40
codegen_flags: <defaults>
</compile_context>

<pallas_src>
import functools

import jax
import jax.numpy as jnp
from jax import lax
from jax.experimental import pallas as pl
from jax.experimental.pallas import tpu as pltpu

# Layer widths of BankNet: num_features -> 64 -> 32 -> 16 -> 8 -> 4 -> 2
HIDDEN_SIZES = [64, 32, 16, 8, 4, 2]


def banknet_kernel(x_ref,
                   w1_ref, b1_ref,
                   w2_ref, b2_ref,
                   w3_ref, b3_ref,
                   w4_ref, b4_ref,
                   w5_ref, b5_ref,
                   w6_ref, b6_ref,
                   o_ref, *, tc, n_chunks):
    # Weights/biases are tiny (<100 KiB) and resident across the grid; load
    # once per grid step, hoisted out of the chunk loop.
    w1, b1 = w1_ref[...], b1_ref[...]
    w2, b2 = w2_ref[...], b2_ref[...]
    w3, b3 = w3_ref[...], b3_ref[...]
    w4, b4 = w4_ref[...], b4_ref[...]
    w5, b5 = w5_ref[...], b5_ref[...]
    w6, b6 = w6_ref[...], b6_ref[...]

    # Contract the feature axes: W (out, in) x X (tc, in) -> (out, tc).
    # Transposed-RHS dot (same dimension_numbers as flash-attention q @ k.T);
    # puts batch on the lane axis without any wrapper transpose of x.
    nt_dims = (((1,), (1,)), ((), ()))

    # Static unroll over independent lane chunks: intermediates for one chunk
    # ((64, tc) f32 and smaller) stay register-resident between the dots.
    for c in range(n_chunks):
        lo = c * tc
        xc = x_ref[lo:lo + tc, :]                       # (tc, F) native layout
        h = lax.dot_general(w1, xc, nt_dims,
                            preferred_element_type=jnp.float32) + b1
        h = jnp.maximum(h, 0.0)
        h = jnp.maximum(jnp.dot(w2, h, preferred_element_type=jnp.float32) + b2, 0.0)
        h = jnp.maximum(jnp.dot(w3, h, preferred_element_type=jnp.float32) + b3, 0.0)
        h = jnp.maximum(jnp.dot(w4, h, preferred_element_type=jnp.float32) + b4, 0.0)
        h = jnp.maximum(jnp.dot(w5, h, preferred_element_type=jnp.float32) + b5, 0.0)
        h = jnp.dot(w6, h, preferred_element_type=jnp.float32) + b6  # no ReLU
        o_ref[:, lo:lo + tc] = h.astype(o_ref.dtype)    # lane-dense (2, tc) store


def _round_up(n, m):
    return ((n + m - 1) // m) * m


@functools.partial(jax.jit, static_argnames=("batch_tile",))
def banknet_forward(x, params, *, batch_tile=8192):
    """x: (batch, num_features) f32 (native layout; no wrapper transpose/pad).

    params: list of (W, b) per layer with W in PyTorch layout (out, in)
    and b shaped (out, 1).
    """
    batch, num_features = x.shape
    out_dim = params[-1][0].shape[0]

    # Lane tile: multiple of 128, capped at batch_tile.
    tb = min(batch_tile, _round_up(batch, 128))
    # v7x: make sure there are >= 2 grid steps so the "parallel" axis shards
    # across both TensorCores (only when each half still has >= 1024 lanes).
    if pl.cdiv(batch, tb) < 2 and tb >= 2048:
        tb = _round_up(pl.cdiv(batch, 2), 128)
    grid_n = pl.cdiv(batch, tb)

    # In-kernel lane sub-tile so per-layer intermediates fit the vreg file.
    if tb % 512 == 0:
        tc = 512
    elif tb % 256 == 0:
        tc = 256
    else:
        tc = 128
    n_chunks = tb // tc

    flat_params = []
    in_specs = [pl.BlockSpec((tb, num_features), lambda i: (i, 0))]
    for (w, b) in params:
        flat_params.extend([w, b])
        # Full-array blocks with constant index_map: resident across the grid.
        in_specs.append(pl.BlockSpec(w.shape, lambda i: (0, 0)))
        in_specs.append(pl.BlockSpec(b.shape, lambda i: (0, 0)))

    flops = 2 * batch * sum(int(w.shape[0]) * int(w.shape[1]) for w, _ in params)
    bytes_accessed = (batch * num_features * 4
                      + batch * out_dim * 4
                      + sum(int(w.size) * 4 + int(b.size) * 4 for w, b in params))

    out_t = pl.pallas_call(
        functools.partial(banknet_kernel, tc=tc, n_chunks=n_chunks),
        out_shape=jax.ShapeDtypeStruct((out_dim, batch), jnp.float32),
        grid_spec=pltpu.PrefetchScalarGridSpec(
            num_scalar_prefetch=0,
            grid=(grid_n,),
            in_specs=in_specs,
            out_specs=pl.BlockSpec((out_dim, tb), lambda i: (0, i)),
        ),
        compiler_params=pltpu.CompilerParams(
            dimension_semantics=("parallel",)),
        cost_estimate=pl.CostEstimate(
            flops=flops, transcendentals=0, bytes_accessed=bytes_accessed),
    )(x, *flat_params)

    # (2, batch) -> (batch, 2) inside the same jit (fuses; no extra op launch).
    return out_t.T


def init_banknet_params(num_of_features, key):
    """Deterministic init mimicking PyTorch nn.Linear (uniform +/- 1/sqrt(fan_in)).

    Weights stored in PyTorch layout (out_features, in_features);
    biases stored as (out_features, 1) so they broadcast along the lane axis.
    """
    params = []
    in_dim = num_of_features
    for out_dim in HIDDEN_SIZES:
        key, kw, kb = jax.random.split(key, 3)
        bound = 1.0 / jnp.sqrt(jnp.float32(in_dim))
        w = jax.random.uniform(kw, (out_dim, in_dim), jnp.float32,
                               minval=-bound, maxval=bound)
        b = jax.random.uniform(kb, (out_dim, 1), jnp.float32,
                               minval=-bound, maxval=bound)
        params.append((w, b))
        in_dim = out_dim
    return params


def banknet_reference(x, params):
    """Plain-JAX reference of the same forward pass (PyTorch semantics)."""
    h = x
    n = len(params)
    for i, (w, b) in enumerate(params):
        h = h @ w.T + b.T
        if i < n - 1:
            h = jnp.maximum(h, 0.0)
    return h


if __name__ == "__main__":
    num_of_features = 16
    batch = 256

    key = jax.random.PRNGKey(0)
    key, kx = jax.random.split(key)
    # PyTorch forward flattens to (batch, num_features); we build it flat.
    x = jax.random.normal(kx, (batch, num_of_features), jnp.float32)

    params = init_banknet_params(num_of_features, key)

    out = banknet_forward(x, params)
    out = jax.block_until_ready(out)

    ref = banknet_reference(x, params)
    assert out.shape == (batch, 2), out.shape
    assert jnp.allclose(out, ref, atol=1e-5, rtol=1e-5), (
        f"max abs err {jnp.max(jnp.abs(out - ref))}")

    print("KERNEL_OK")
</pallas_src>

<mosaic_0001>
module attributes {stable_mosaic.version = 11 : i64} {
  func.func @banknet_kernel(%arg0: i32, %arg1: memref<256x16xf32, #tpu.memory_space<vmem>>, %arg2: memref<64x16xf32, #tpu.memory_space<vmem>>, %arg3: memref<64x1xf32, #tpu.memory_space<vmem>>, %arg4: memref<32x64xf32, #tpu.memory_space<vmem>>, %arg5: memref<32x1xf32, #tpu.memory_space<vmem>>, %arg6: memref<16x32xf32, #tpu.memory_space<vmem>>, %arg7: memref<16x1xf32, #tpu.memory_space<vmem>>, %arg8: memref<8x16xf32, #tpu.memory_space<vmem>>, %arg9: memref<8x1xf32, #tpu.memory_space<vmem>>, %arg10: memref<4x8xf32, #tpu.memory_space<vmem>>, %arg11: memref<4x1xf32, #tpu.memory_space<vmem>>, %arg12: memref<2x4xf32, #tpu.memory_space<vmem>>, %arg13: memref<2x1xf32, #tpu.memory_space<vmem>>, %arg14: memref<2x256xf32, #tpu.memory_space<vmem>>) attributes {dimension_semantics = [#tpu.dimension_semantics<parallel>], iteration_bounds = array<i64: 1>, scalar_prefetch = 0 : i64, scratch_operands = 0 : i64, tpu.core_type = #tpu.core_type<tc>, window_params = [{transform_indices = @transform_0, window_bounds = array<i64: 256, 16>}, {pipeline_mode = #tpu.pipeline_mode<synchronous>, transform_indices = @transform_1, window_bounds = array<i64: 64, 16>}, {pipeline_mode = #tpu.pipeline_mode<synchronous>, transform_indices = @transform_2, window_bounds = array<i64: 64, 1>}, {pipeline_mode = #tpu.pipeline_mode<synchronous>, transform_indices = @transform_3, window_bounds = array<i64: 32, 64>}, {pipeline_mode = #tpu.pipeline_mode<synchronous>, transform_indices = @transform_4, window_bounds = array<i64: 32, 1>}, {pipeline_mode = #tpu.pipeline_mode<synchronous>, transform_indices = @transform_5, window_bounds = array<i64: 16, 32>}, {pipeline_mode = #tpu.pipeline_mode<synchronous>, transform_indices = @transform_6, window_bounds = array<i64: 16, 1>}, {pipeline_mode = #tpu.pipeline_mode<synchronous>, transform_indices = @transform_7, window_bounds = array<i64: 8, 16>}, {pipeline_mode = #tpu.pipeline_mode<synchronous>, transform_indices = @transform_8, window_bounds = array<i64: 8, 1>}, {pipeline_mode = #tpu.pipeline_mode<synchronous>, transform_indices = @transform_9, window_bounds = array<i64: 4, 8>}, {pipeline_mode = #tpu.pipeline_mode<synchronous>, transform_indices = @transform_10, window_bounds = array<i64: 4, 1>}, {pipeline_mode = #tpu.pipeline_mode<synchronous>, transform_indices = @transform_11, window_bounds = array<i64: 2, 4>}, {pipeline_mode = #tpu.pipeline_mode<synchronous>, transform_indices = @transform_12, window_bounds = array<i64: 2, 1>}, {transform_indices = @transform_13, window_bounds = array<i64: 2, 256>}]} {
    %c0 = arith.constant 0 : index
    %c0_0 = arith.constant 0 : index
    %0 = vector.load %arg2[%c0, %c0_0] : memref<64x16xf32, #tpu.memory_space<vmem>>, vector<64x16xf32>
    %c0_1 = arith.constant 0 : index
    %c0_2 = arith.constant 0 : index
    %1 = vector.load %arg3[%c0_1, %c0_2] : memref<64x1xf32, #tpu.memory_space<vmem>>, vector<64x1xf32>
    %c0_3 = arith.constant 0 : index
    %c0_4 = arith.constant 0 : index
    %2 = vector.load %arg4[%c0_3, %c0_4] : memref<32x64xf32, #tpu.memory_space<vmem>>, vector<32x64xf32>
    %c0_5 = arith.constant 0 : index
    %c0_6 = arith.constant 0 : index
    %3 = vector.load %arg5[%c0_5, %c0_6] : memref<32x1xf32, #tpu.memory_space<vmem>>, vector<32x1xf32>
    %c0_7 = arith.constant 0 : index
    %c0_8 = arith.constant 0 : index
    %4 = vector.load %arg6[%c0_7, %c0_8] : memref<16x32xf32, #tpu.memory_space<vmem>>, vector<16x32xf32>
    %c0_9 = arith.constant 0 : index
    %c0_10 = arith.constant 0 : index
    %5 = vector.load %arg7[%c0_9, %c0_10] : memref<16x1xf32, #tpu.memory_space<vmem>>, vector<16x1xf32>
    %c0_11 = arith.constant 0 : index
    %c0_12 = arith.constant 0 : index
    %6 = vector.load %arg8[%c0_11, %c0_12] : memref<8x16xf32, #tpu.memory_space<vmem>>, vector<8x16xf32>
    %c0_13 = arith.constant 0 : index
    %c0_14 = arith.constant 0 : index
    %7 = vector.load %arg9[%c0_13, %c0_14] : memref<8x1xf32, #tpu.memory_space<vmem>>, vector<8x1xf32>
    %c0_15 = arith.constant 0 : index
    %c0_16 = arith.constant 0 : index
    %8 = vector.load %arg10[%c0_15, %c0_16] : memref<4x8xf32, #tpu.memory_space<vmem>>, vector<4x8xf32>
    %c0_17 = arith.constant 0 : index
    %c0_18 = arith.constant 0 : index
    %9 = vector.load %arg11[%c0_17, %c0_18] : memref<4x1xf32, #tpu.memory_space<vmem>>, vector<4x1xf32>
    %c0_19 = arith.constant 0 : index
    %c0_20 = arith.constant 0 : index
    %10 = vector.load %arg12[%c0_19, %c0_20] : memref<2x4xf32, #tpu.memory_space<vmem>>, vector<2x4xf32>
    %c0_21 = arith.constant 0 : index
    %c0_22 = arith.constant 0 : index
    %11 = vector.load %arg13[%c0_21, %c0_22] : memref<2x1xf32, #tpu.memory_space<vmem>>, vector<2x1xf32>
    %c0_23 = arith.constant 0 : index
    %c0_24 = arith.constant 0 : index
    %12 = vector.load %arg1[%c0_23, %c0_24] : memref<256x16xf32, #tpu.memory_space<vmem>>, vector<256x16xf32>
    %cst = arith.constant dense<0.000000e+00> : vector<64x256xf32>
    %13 = tpu.matmul %0, %12, %cst {dimension_numbers = #tpu.dot_dimension_numbers<[1], [1], [0], [0], [0, 0, 1, 0], [], []>} : vector<64x16xf32>, vector<256x16xf32>, vector<64x256xf32> -> vector<64x256xf32>
    %14 = vector.broadcast %1 : vector<64x1xf32> to vector<64x256xf32>
    %15 = arith.addf %13, %14 : vector<64x256xf32>
    %cst_25 = arith.constant 0.000000e+00 : f32
    %16 = vector.broadcast %cst_25 : f32 to vector<64x256xf32>
    %17 = arith.maximumf %15, %16 : vector<64x256xf32>
    %cst_26 = arith.constant dense<0.000000e+00> : vector<32x256xf32>
    %18 = tpu.matmul %2, %17, %cst_26 {dimension_numbers = #tpu.dot_dimension_numbers<[1], [0], [0], [1], [0, 0, 1, 1], [], []>} : vector<32x64xf32>, vector<64x256xf32>, vector<32x256xf32> -> vector<32x256xf32>
    %19 = vector.broadcast %3 : vector<32x1xf32> to vector<32x256xf32>
    %20 = arith.addf %18, %19 : vector<32x256xf32>
    %cst_27 = arith.constant 0.000000e+00 : f32
    %21 = vector.broadcast %cst_27 : f32 to vector<32x256xf32>
    %22 = arith.maximumf %20, %21 : vector<32x256xf32>
    %cst_28 = arith.constant dense<0.000000e+00> : vector<16x256xf32>
    %23 = tpu.matmul %4, %22, %cst_28 {dimension_numbers = #tpu.dot_dimension_numbers<[1], [0], [0], [1], [0, 0, 1, 1], [], []>} : vector<16x32xf32>, vector<32x256xf32>, vector<16x256xf32> -> vector<16x256xf32>
    %24 = vector.broadcast %5 : vector<16x1xf32> to vector<16x256xf32>
    %25 = arith.addf %23, %24 : vector<16x256xf32>
    %cst_29 = arith.constant 0.000000e+00 : f32
    %26 = vector.broadcast %cst_29 : f32 to vector<16x256xf32>
    %27 = arith.maximumf %25, %26 : vector<16x256xf32>
    %cst_30 = arith.constant dense<0.000000e+00> : vector<8x256xf32>
    %28 = tpu.matmul %6, %27, %cst_30 {dimension_numbers = #tpu.dot_dimension_numbers<[1], [0], [0], [1], [0, 0, 1, 1], [], []>} : vector<8x16xf32>, vector<16x256xf32>, vector<8x256xf32> -> vector<8x256xf32>
    %29 = vector.broadcast %7 : vector<8x1xf32> to vector<8x256xf32>
    %30 = arith.addf %28, %29 : vector<8x256xf32>
    %cst_31 = arith.constant 0.000000e+00 : f32
    %31 = vector.broadcast %cst_31 : f32 to vector<8x256xf32>
    %32 = arith.maximumf %30, %31 : vector<8x256xf32>
    %cst_32 = arith.constant dense<0.000000e+00> : vector<4x256xf32>
    %33 = tpu.matmul %8, %32, %cst_32 {dimension_numbers = #tpu.dot_dimension_numbers<[1], [0], [0], [1], [0, 0, 1, 1], [], []>} : vector<4x8xf32>, vector<8x256xf32>, vector<4x256xf32> -> vector<4x256xf32>
    %34 = vector.broadcast %9 : vector<4x1xf32> to vector<4x256xf32>
    %35 = arith.addf %33, %34 : vector<4x256xf32>
    %cst_33 = arith.constant 0.000000e+00 : f32
    %36 = vector.broadcast %cst_33 : f32 to vector<4x256xf32>
    %37 = arith.maximumf %35, %36 : vector<4x256xf32>
    %cst_34 = arith.constant dense<0.000000e+00> : vector<2x256xf32>
    %38 = tpu.matmul %10, %37, %cst_34 {dimension_numbers = #tpu.dot_dimension_numbers<[1], [0], [0], [1], [0, 0, 1, 1], [], []>} : vector<2x4xf32>, vector<4x256xf32>, vector<2x256xf32> -> vector<2x256xf32>
    %39 = vector.broadcast %11 : vector<2x1xf32> to vector<2x256xf32>
    %40 = arith.addf %38, %39 : vector<2x256xf32>
    %c0_35 = arith.constant 0 : index
    %c0_36 = arith.constant 0 : index
    %41 = vector.load %arg14[%c0_35, %c0_36] : memref<2x256xf32, #tpu.memory_space<vmem>>, vector<2x256xf32>
    tpu.vector_store %arg14[%c0_35, %c0_36], %40 {strides = array<i32>} : memref<2x256xf32, #tpu.memory_space<vmem>>, vector<2x256xf32>,
    return
  }
  func.func @transform_0(%arg0: i32) -> (i32, i32) {
    %c0_i32 = arith.constant 0 : i32
    %c0_i32_0 = arith.constant 0 : i32
    return %arg0, %c0_i32 : i32, i32
  }
  func.func @transform_1(%arg0: i32) -> (i32, i32) {
    %c0_i32 = arith.constant 0 : i32
    %c0_i32_0 = arith.constant 0 : i32
    %c0_i32_1 = arith.constant 0 : i32
    return %c0_i32, %c0_i32_0 : i32, i32
  }
  func.func @transform_2(%arg0: i32) -> (i32, i32) {
    %c0_i32 = arith.constant 0 : i32
    %c0_i32_0 = arith.constant 0 : i32
    %c0_i32_1 = arith.constant 0 : i32
    return %c0_i32, %c0_i32_0 : i32, i32
  }
  func.func @transform_3(%arg0: i32) -> (i32, i32) {
    %c0_i32 = arith.constant 0 : i32
    %c0_i32_0 = arith.constant 0 : i32
    %c0_i32_1 = arith.constant 0 : i32
    return %c0_i32, %c0_i32_0 : i32, i32
  }
  func.func @transform_4(%arg0: i32) -> (i32, i32) {
    %c0_i32 = arith.constant 0 : i32
    %c0_i32_0 = arith.constant 0 : i32
    %c0_i32_1 = arith.constant 0 : i32
    return %c0_i32, %c0_i32_0 : i32, i32
  }
  func.func @transform_5(%arg0: i32) -> (i32, i32) {
    %c0_i32 = arith.constant 0 : i32
    %c0_i32_0 = arith.constant 0 : i32
    %c0_i32_1 = arith.constant 0 : i32
    return %c0_i32, %c0_i32_0 : i32, i32
  }
  func.func @transform_6(%arg0: i32) -> (i32, i32) {
    %c0_i32 = arith.constant 0 : i32
    %c0_i32_0 = arith.constant 0 : i32
    %c0_i32_1 = arith.constant 0 : i32
    return %c0_i32, %c0_i32_0 : i32, i32
  }
  func.func @transform_7(%arg0: i32) -> (i32, i32) {
    %c0_i32 = arith.constant 0 : i32
    %c0_i32_0 = arith.constant 0 : i32
    %c0_i32_1 = arith.constant 0 : i32
    return %c0_i32, %c0_i32_0 : i32, i32
  }
  func.func @transform_8(%arg0: i32) -> (i32, i32) {
    %c0_i32 = arith.constant 0 : i32
    %c0_i32_0 = arith.constant 0 : i32
    %c0_i32_1 = arith.constant 0 : i32
    return %c0_i32, %c0_i32_0 : i32, i32
  }
  func.func @transform_9(%arg0: i32) -> (i32, i32) {
    %c0_i32 = arith.constant 0 : i32
    %c0_i32_0 = arith.constant 0 : i32
    %c0_i32_1 = arith.constant 0 : i32
    return %c0_i32, %c0_i32_0 : i32, i32
  }
  func.func @transform_10(%arg0: i32) -> (i32, i32) {
    %c0_i32 = arith.constant 0 : i32
    %c0_i32_0 = arith.constant 0 : i32
    %c0_i32_1 = arith.constant 0 : i32
    return %c0_i32, %c0_i32_0 : i32, i32
  }
  func.func @transform_11(%arg0: i32) -> (i32, i32) {
    %c0_i32 = arith.constant 0 : i32
    %c0_i32_0 = arith.constant 0 : i32
    %c0_i32_1 = arith.constant 0 : i32
    return %c0_i32, %c0_i32_0 : i32, i32
  }
  func.func @transform_12(%arg0: i32) -> (i32, i32) {
    %c0_i32 = arith.constant 0 : i32
    %c0_i32_0 = arith.constant 0 : i32
    %c0_i32_1 = arith.constant 0 : i32
    return %c0_i32, %c0_i32_0 : i32, i32
  }
  func.func @transform_13(%arg0: i32) -> (i32, i32) {
    %c0_i32 = arith.constant 0 : i32
    %c0_i32_0 = arith.constant 0 : i32
    return %c0_i32, %arg0 : i32, i32
  }
}

</mosaic_0001>

<llo_original>
// kernel: banknet_forward.1
$region0: #{banknet_forward.1}
  #allocation0 [shape = 'u32[]', space=smem, size = 0x4, offset = 0x4, fixed_abs, tag = 'smem constant byte address 0x4 - core index']
  #allocation1 [shape = 'u32[144,128]{1,0:T(1,128)}', space=vmem, size = 0x12000, scoped, tag = 'internal scratch']
  %s0 = inlined_call_operand.vmem [shape: f32[256,16], index: 0, kind: input, shape index: {}]
  %s1 = inlined_call_operand.vmem [shape: f32[64,16], index: 1, kind: input, shape index: {}]
  %s2 = inlined_call_operand.vmem [shape: f32[64,1], index: 2, kind: input, shape index: {}]
  %s3 = inlined_call_operand.vmem [shape: f32[32,64], index: 3, kind: input, shape index: {}]
  %s4 = inlined_call_operand.vmem [shape: f32[32,1], index: 4, kind: input, shape index: {}]
  %s5 = inlined_call_operand.vmem [shape: f32[16,32], index: 5, kind: input, shape index: {}]
  %s6 = inlined_call_operand.vmem [shape: f32[16,1], index: 6, kind: input, shape index: {}]
  %s7 = inlined_call_operand.vmem [shape: f32[8,16], index: 7, kind: input, shape index: {}]
  %s8 = inlined_call_operand.vmem [shape: f32[8,1], index: 8, kind: input, shape index: {}]
  %s9 = inlined_call_operand.vmem [shape: f32[4,8], index: 9, kind: input, shape index: {}]
  %s10 = inlined_call_operand.vmem [shape: f32[4,1], index: 10, kind: input, shape index: {}]
  %s11 = inlined_call_operand.vmem [shape: f32[2,4], index: 11, kind: input, shape index: {}]
  %s12 = inlined_call_operand.vmem [shape: f32[2,1], index: 12, kind: input, shape index: {}]
  %s13 = inlined_call_operand.hbm [shape: f32[2,256], index: 13, kind: output, shape index: {}]
  %s14 = sld [smem:[#allocation0]]
  $region62: #{banknet_forward.1} parent=0
    _
  %s16 = ssub.s32 1, %s14
  %s17 = scalar_select 0, %s16, %s14
  $region1: #{banknet_forward.1} parent=0
    #allocation2 [shape = 'u8[2048]{0}', space=vmem, size = 0x800, scoped, tag = 'output window, operand 0, single buffered']
    #allocation3 [shape = 's32[1]{0}', space=sflag, size = 0x4, scoped, tag = 'scoped memory for banknet_forward.1']
    %18 = vsyncpa [#allocation3], 0
    // Predicated region
    $region2: #{banknet_forward.1} parent=1 // pred_check
      _
    $region3: #{banknet_forward.1} parent=1 // pred_check_branch
      %20 = sbr.rel (0) target = $region5
    $region4: #{banknet_forward.1} parent=1 // pred_region
      _
    $region5: #{banknet_forward.1} parent=1 // pred_fallthru
      _
    // Predicated region
    $region6: #{banknet_forward.1} parent=1 // pred_check
      _
    $region7: #{banknet_forward.1} parent=1 // pred_check_branch
      %22 = sbr.rel (0) target = $region9
    $region8: #{banknet_forward.1} parent=1 // pred_region
      _
    $region9: #{banknet_forward.1} parent=1 // pred_fallthru
      _
    // Predicated region
    $region10: #{banknet_forward.1} parent=1 // pred_check
      _
    $region11: #{banknet_forward.1} parent=1 // pred_check_branch
      %24 = sbr.rel (0) target = $region13
    $region12: #{banknet_forward.1} parent=1 // pred_region
      _
    $region13: #{banknet_forward.1} parent=1 // pred_fallthru
      _
    // Predicated region
    $region14: #{banknet_forward.1} parent=1 // pred_check
      _
    $region15: #{banknet_forward.1} parent=1 // pred_check_branch
      %26 = sbr.rel (0) target = $region17
    $region16: #{banknet_forward.1} parent=1 // pred_region
      _
    $region17: #{banknet_forward.1} parent=1 // pred_fallthru
      _
    // Predicated region
    $region18: #{banknet_forward.1} parent=1 // pred_check
      _
    $region19: #{banknet_forward.1} parent=1 // pred_check_branch
      %28 = sbr.rel (0) target = $region21
    $region20: #{banknet_forward.1} parent=1 // pred_region
      _
    $region21: #{banknet_forward.1} parent=1 // pred_fallthru
      _
    // Predicated region
    $region22: #{banknet_forward.1} parent=1 // pred_check
      _
    $region23: #{banknet_forward.1} parent=1 // pred_check_branch
      %30 = sbr.rel (0) target = $region25
    $region24: #{banknet_forward.1} parent=1 // pred_region
      _
    $region25: #{banknet_forward.1} parent=1 // pred_fallthru
      _
    // Predicated region
    $region26: #{banknet_forward.1} parent=1 // pred_check
      _
    $region27: #{banknet_forward.1} parent=1 // pred_check_branch
      %32 = sbr.rel (0) target = $region29
    $region28: #{banknet_forward.1} parent=1 // pred_region
      _
    $region29: #{banknet_forward.1} parent=1 // pred_fallthru
      _
    // Predicated region
    $region30: #{banknet_forward.1} parent=1 // pred_check
      _
    $region31: #{banknet_forward.1} parent=1 // pred_check_branch
      %34 = sbr.rel (0) target = $region33
    $region32: #{banknet_forward.1} parent=1 // pred_region
      _
    $region33: #{banknet_forward.1} parent=1 // pred_fallthru
      _
    // Predicated region
    $region34: #{banknet_forward.1} parent=1 // pred_check
      _
    $region35: #{banknet_forward.1} parent=1 // pred_check_branch
      %36 = sbr.rel (0) target = $region37
    $region36: #{banknet_forward.1} parent=1 // pred_region
      _
    $region37: #{banknet_forward.1} parent=1 // pred_fallthru
      _
    // Predicated region
    $region38: #{banknet_forward.1} parent=1 // pred_check
      _
    $region39: #{banknet_forward.1} parent=1 // pred_check_branch
      %38 = sbr.rel (0) target = $region41
    $region40: #{banknet_forward.1} parent=1 // pred_region
      _
    $region41: #{banknet_forward.1} parent=1 // pred_fallthru
      _
    // Predicated region
    $region42: #{banknet_forward.1} parent=1 // pred_check
      _
    $region43: #{banknet_forward.1} parent=1 // pred_check_branch
      %40 = sbr.rel (0) target = $region45
    $region44: #{banknet_forward.1} parent=1 // pred_region
      _
    $region45: #{banknet_forward.1} parent=1 // pred_fallthru
      _
    // Predicated region
    $region46: #{banknet_forward.1} parent=1 // pred_check
      _
    $region47: #{banknet_forward.1} parent=1 // pred_check_branch
      %42 = sbr.rel (0) target = $region49
    $region48: #{banknet_forward.1} parent=1 // pred_region
      _
    $region49: #{banknet_forward.1} parent=1 // pred_fallthru
      _
    // Predicated region
    $region50: #{banknet_forward.1} parent=1 // pred_check
      _
    $region51: #{banknet_forward.1} parent=1 // pred_check_branch
      %44 = sbr.rel (0) target = $region53
    $region52: #{banknet_forward.1} parent=1 // pred_region
      _
    $region53: #{banknet_forward.1} parent=1 // pred_fallthru
      _
    %v45 = vld [vmem:[%s1] sm:$0xff]
    %v46 = vld [vmem:[%s1 + $0x8] sm:$0xff]
    %v47 = vld [vmem:[%s1 + $0x10] sm:$0xff]
    %v48 = vld [vmem:[%s1 + $0x18] sm:$0xff]
    %v49 = vld [vmem:[%s1 + $0x20] sm:$0xff]
    %v50 = vld [vmem:[%s1 + $0x28] sm:$0xff]
    %v51 = vld [vmem:[%s1 + $0x30] sm:$0xff]
    %v52 = vld [vmem:[%s1 + $0x38] sm:$0xff]
    %v53 = vld [vmem:[%s2] sm:$0xff]
    %v54 = vld [vmem:[%s2 + $0x8] sm:$0xff]
    %v55 = vld [vmem:[%s2 + $0x10] sm:$0xff]
    %v56 = vld [vmem:[%s2 + $0x18] sm:$0xff]
    %v57 = vld [vmem:[%s2 + $0x20] sm:$0xff]
    %v58 = vld [vmem:[%s2 + $0x28] sm:$0xff]
    %v59 = vld [vmem:[%s2 + $0x30] sm:$0xff]
    %v60 = vld [vmem:[%s2 + $0x38] sm:$0xff]
    %v61 = vld [vmem:[%s3] sm:$0xff]
    %v62 = vld [vmem:[%s3 + $0x8] sm:$0xff]
    %v63 = vld [vmem:[%s3 + $0x10] sm:$0xff]
    %v64 = vld [vmem:[%s3 + $0x18] sm:$0xff]
    %v65 = vld [vmem:[%s4] sm:$0xff]
    %v66 = vld [vmem:[%s4 + $0x8] sm:$0xff]
    %v67 = vld [vmem:[%s4 + $0x10] sm:$0xff]
    %v68 = vld [vmem:[%s4 + $0x18] sm:$0xff]
    %v69 = vld [vmem:[%s5] sm:$0xff]
    %v70 = vld [vmem:[%s5 + $0x8] sm:$0xff]
    %v71 = vld [vmem:[%s6] sm:$0xff]
    %v72 = vld [vmem:[%s6 + $0x8] sm:$0xff]
    %v73 = vld [vmem:[%s7] sm:$0xff]
    %v74 = vld [vmem:[%s8] sm:$0xff]
    %v75 = vld [vmem:[%s9] sm:$0xf]
    %v76 = vld [vmem:[%s10] sm:$0xf]
    %v77 = vld [vmem:[%s11] sm:$0x3]
    %v78 = vld [vmem:[%s12] sm:$0x3]
    %v79 = vld [vmem:[%s0] sm:$0xff]
    %v80 = vld [vmem:[%s0 + $0x8] sm:$0xff]
    %v81 = vld [vmem:[%s0 + $0x10] sm:$0xff]
    %v82 = vld [vmem:[%s0 + $0x18] sm:$0xff]
    %v83 = vld [vmem:[%s0 + $0x20] sm:$0xff]
    %v84 = vld [vmem:[%s0 + $0x28] sm:$0xff]
    %v85 = vld [vmem:[%s0 + $0x30] sm:$0xff]
    %v86 = vld [vmem:[%s0 + $0x38] sm:$0xff]
    %v87 = vld [vmem:[%s0 + $0x40] sm:$0xff]
    %v88 = vld [vmem:[%s0 + $0x48] sm:$0xff]
    %v89 = vld [vmem:[%s0 + $0x50] sm:$0xff]
    %v90 = vld [vmem:[%s0 + $0x58] sm:$0xff]
    %v91 = vld [vmem:[%s0 + $0x60] sm:$0xff]
    %v92 = vld [vmem:[%s0 + $0x68] sm:$0xff]
    %v93 = vld [vmem:[%s0 + $0x70] sm:$0xff]
    %v94 = vld [vmem:[%s0 + $0x78] sm:$0xff]
    %v95 = vld [vmem:[%s0 + $0x80] sm:$0xff]
    %v96 = vld [vmem:[%s0 + $0x88] sm:$0xff]
    %v97 = vld [vmem:[%s0 + $0x90] sm:$0xff]
    %v98 = vld [vmem:[%s0 + $0x98] sm:$0xff]
    %v99 = vld [vmem:[%s0 + $0xa0] sm:$0xff]
    %v100 = vld [vmem:[%s0 + $0xa8] sm:$0xff]
    %v101 = vld [vmem:[%s0 + $0xb0] sm:$0xff]
    %v102 = vld [vmem:[%s0 + $0xb8] sm:$0xff]
    %v103 = vld [vmem:[%s0 + $0xc0] sm:$0xff]
    %v104 = vld [vmem:[%s0 + $0xc8] sm:$0xff]
    %v105 = vld [vmem:[%s0 + $0xd0] sm:$0xff]
    %v106 = vld [vmem:[%s0 + $0xd8] sm:$0xff]
    %v107 = vld [vmem:[%s0 + $0xe0] sm:$0xff]
    %v108 = vld [vmem:[%s0 + $0xe8] sm:$0xff]
    %v109 = vld [vmem:[%s0 + $0xf0] sm:$0xff]
    %v110 = vld [vmem:[%s0 + $0xf8] sm:$0xff]
    %112 = vset.pattern.permute.xlu0 0
    %113 = vperm.xlu0 %112, %v53
    %v114 = vpop.permute.xlu0 %113
    %117 = vset.pattern.permute.xlu0 0
    %118 = vperm.xlu0 %117, %v54
    %v119 = vpop.permute.xlu0 %118
    %122 = vset.pattern.permute.xlu0 0
    %123 = vperm.xlu0 %122, %v55
    %v124 = vpop.permute.xlu0 %123
    %127 = vset.pattern.permute.xlu0 0
    %128 = vperm.xlu0 %127, %v56
    %v129 = vpop.permute.xlu0 %128
    %132 = vset.pattern.permute.xlu0 0
    %133 = vperm.xlu0 %132, %v57
    %v134 = vpop.permute.xlu0 %133
    %137 = vset.pattern.permute.xlu0 0
    %138 = vperm.xlu0 %137, %v58
    %v139 = vpop.permute.xlu0 %138
    %142 = vset.pattern.permute.xlu0 0
    %143 = vperm.xlu0 %142, %v59
    %v144 = vpop.permute.xlu0 %143
    %147 = vset.pattern.permute.xlu0 0
    %148 = vperm.xlu0 %147, %v60
    %v149 = vpop.permute.xlu0 %148
    %vm151 = vcmask 130048
    %v153 = vsel %vm151, %v45, 0
    %v156 = vsel %vm151, %v46, 0
    %v159 = vsel %vm151, %v47, 0
    %v162 = vsel %vm151, %v48, 0
    %v165 = vsel %vm151, %v49, 0
    %v168 = vsel %vm151, %v50, 0
    %v171 = vsel %vm151, %v51, 0
    %v174 = vsel %vm151, %v52, 0
    %v177 = vsel %vm151, %v79, 0
    %v180 = vsel %vm151, %v80, 0
    %v183 = vsel %vm151, %v81, 0
    %v186 = vsel %vm151, %v82, 0
    %v189 = vsel %vm151, %v83, 0
    %v192 = vsel %vm151, %v84, 0
    %v195 = vsel %vm151, %v85, 0
    %v198 = vsel %vm151, %v86, 0
    %v201 = vsel %vm151, %v87, 0
    %v204 = vsel %vm151, %v88, 0
    %v207 = vsel %vm151, %v89, 0
    %v210 = vsel %vm151, %v90, 0
    %v213 = vsel %vm151, %v91, 0
    %v216 = vsel %vm151, %v92, 0
    %v219 = vsel %vm151, %v93, 0
    %v222 = vsel %vm151, %v94, 0
    %v225 = vsel %vm151, %v95, 0
    %v228 = vsel %vm151, %v96, 0
    %v231 = vsel %vm151, %v97, 0
    %v234 = vsel %vm151, %v98, 0
    %v237 = vsel %vm151, %v99, 0
    %v240 = vsel %vm151, %v100, 0
    %v243 = vsel %vm151, %v101, 0
    %v246 = vsel %vm151, %v102, 0
    %v249 = vsel %vm151, %v103, 0
    %v252 = vsel %vm151, %v104, 0
    %v255 = vsel %vm151, %v105, 0
    %v258 = vsel %vm151, %v106, 0
    %v261 = vsel %vm151, %v107, 0
    %v264 = vsel %vm151, %v108, 0
    %v267 = vsel %vm151, %v109, 0
    %v270 = vsel %vm151, %v110, 0
    %272 = vmatprep.subr.mxu0 0.0
    %273 = vmatpush1.xpose.msra.mxu0 %v177
    %274 = vmatprep.subr.mxu0 0.0
    %275 = vmatpush1.xpose.msra.mxu0 %v180
    %276 = vmatprep.subr.mxu0 0.0
    %277 = vmatpush1.xpose.msra.mxu0 %v183
    %278 = vmatprep.subr.mxu0 0.0
    %279 = vmatpush1.xpose.msra.mxu0 %v186
    %280 = vmatprep.subr.mxu0 0.0
    %281 = vmatpush1.xpose.msra.mxu0 %v189
    %282 = vmatprep.subr.mxu0 0.0
    %283 = vmatpush1.xpose.msra.mxu0 %v192
    %284 = vmatprep.subr.mxu0 0.0
    %285 = vmatpush1.xpose.msra.mxu0 %v195
    %286 = vmatprep.subr.mxu0 0.0
    %287 = vmatpush1.xpose.msra.mxu0 %v198
    %288 = vmatprep.subr.mxu0 0.0
    %289 = vmatpush1.xpose.msra.mxu0 %v201
    %290 = vmatprep.subr.mxu0 0.0
    %291 = vmatpush1.xpose.msra.mxu0 %v204
    %292 = vmatprep.subr.mxu0 0.0
    %293 = vmatpush1.xpose.msra.mxu0 %v207
    %294 = vmatprep.subr.mxu0 0.0
    %295 = vmatpush1.xpose.msra.mxu0 %v210
    %296 = vmatprep.subr.mxu0 0.0
    %297 = vmatpush1.xpose.msra.mxu0 %v213
    %298 = vmatprep.subr.mxu0 0.0
    %299 = vmatpush1.xpose.msra.mxu0 %v216
    %300 = vmatprep.subr.mxu0 0.0
    %301 = vmatpush1.xpose.msra.mxu0 %v219
    %302 = vmatprep.subr.mxu0 0.0
    %303 = vmatpush1.xpose.msra.mxu0 %v222
    %304 = vmatprep.subr.mxu0 0.0
    %305 = vmatpush1.xpose.msra.mxu0 %v225
    %306 = vmatprep.subr.mxu0 0.0
    %307 = vmatpush1.xpose.msra.mxu0 %v228
    %308 = vmatprep.subr.mxu0 0.0
    %309 = vmatpush1.xpose.msra.mxu0 %v231
    %310 = vmatprep.subr.mxu0 0.0
    %311 = vmatpush1.xpose.msra.mxu0 %v234
    %312 = vmatprep.subr.mxu0 0.0
    %313 = vmatpush1.xpose.msra.mxu0 %v237
    %314 = vmatprep.subr.mxu0 0.0
    %315 = vmatpush1.xpose.msra.mxu0 %v240
    %316 = vmatprep.subr.mxu0 0.0
    %317 = vmatpush1.xpose.msra.mxu0 %v243
    %318 = vmatprep.subr.mxu0 0.0
    %319 = vmatpush1.xpose.msra.mxu0 %v246
    %320 = vmatprep.subr.mxu0 0.0
    %321 = vmatpush1.xpose.msra.mxu0 %v249
    %322 = vmatprep.subr.mxu0 0.0
    %323 = vmatpush1.xpose.msra.mxu0 %v252
    %324 = vmatprep.subr.mxu0 0.0
    %325 = vmatpush1.xpose.msra.mxu0 %v255
    %326 = vmatprep.subr.mxu0 0.0
    %327 = vmatpush1.xpose.msra.mxu0 %v258
    %328 = vmatprep.subr.mxu0 0.0
    %329 = vmatpush1.xpose.msra.mxu0 %v261
    %330 = vmatprep.subr.mxu0 0.0
    %331 = vmatpush1.xpose.msra.mxu0 %v264
    %332 = vmatprep.subr.mxu0 0.0
    %333 = vmatpush1.xpose.msra.mxu0 %v267
    %334 = vmatprep.subr.mxu0 0.0
    %335 = vmatpush1.xpose.msra.mxu0 %v270
    %336 = vmatprep.mubr.f32.mxu0 0.0
    %337 = vmatmul.mubr.f32.gmra.mrb[0].mxu0 %v153
    %v338 = vpop.f32.mrb[0].mxu0
    %v339 = vadd.f32 %v114, %v338
    %v340 = vpop.f32.mrb[0].mxu0
    %v341 = vadd.f32 %v114, %v340
    %342 = vmatprep.mubr.f32.mxu0 0.0
    %343 = vmatmul.mubr.f32.gmra.mrb[0].mxu0 %v156
    %v344 = vpop.f32.mrb[0].mxu0
    %v345 = vadd.f32 %v119, %v344
    %v346 = vpop.f32.mrb[0].mxu0
    %v347 = vadd.f32 %v119, %v346
    %348 = vmatprep.mubr.f32.mxu0 0.0
    %349 = vmatmul.mubr.f32.gmra.mrb[0].mxu0 %v159
    %v350 = vpop.f32.mrb[0].mxu0
    %v351 = vadd.f32 %v124, %v350
    %v352 = vpop.f32.mrb[0].mxu0
    %v353 = vadd.f32 %v124, %v352
    %354 = vmatprep.mubr.f32.mxu0 0.0
    %355 = vmatmul.mubr.f32.gmra.mrb[0].mxu0 %v162
    %v356 = vpop.f32.mrb[0].mxu0
    %v357 = vadd.f32 %v129, %v356
    %v358 = vpop.f32.mrb[0].mxu0
    %v359 = vadd.f32 %v129, %v358
    %360 = vmatprep.mubr.f32.mxu0 0.0
    %361 = vmatmul.mubr.f32.gmra.mrb[0].mxu0 %v165
    %v362 = vpop.f32.mrb[0].mxu0
    %v363 = vadd.f32 %v134, %v362
    %v364 = vpop.f32.mrb[0].mxu0
    %v365 = vadd.f32 %v134, %v364
    %366 = vmatprep.mubr.f32.mxu0 0.0
    %367 = vmatmul.mubr.f32.gmra.mrb[0].mxu0 %v168
    %v368 = vpop.f32.mrb[0].mxu0
    %v369 = vadd.f32 %v139, %v368
    %v370 = vpop.f32.mrb[0].mxu0
    %v371 = vadd.f32 %v139, %v370
    %372 = vmatprep.mubr.f32.mxu0 0.0
    %373 = vmatmul.mubr.f32.gmra.mrb[0].mxu0 %v171
    %v374 = vpop.f32.mrb[0].mxu0
    %v375 = vadd.f32 %v144, %v374
    %v376 = vpop.f32.mrb[0].mxu0
    %v377 = vadd.f32 %v144, %v376
    %378 = vmatprep.mubr.f32.mxu0 0.0
    %379 = vmatmul.mubr.f32.gmra.mrb[0].mxu0 %v174
    %v380 = vpop.f32.mrb[0].mxu0
    %v381 = vadd.f32 %v149, %v380
    %v382 = vpop.f32.mrb[0].mxu0
    %v383 = vadd.f32 %v149, %v382
    %384 = vdwg.mxu0
    %v385 = vmax.f32 %v339, 0.0
    %v386 = vmax.f32 %v341, 0.0
    %v387 = vmax.f32 %v345, 0.0
    %v388 = vmax.f32 %v347, 0.0
    %v389 = vmax.f32 %v351, 0.0
    %v390 = vmax.f32 %v353, 0.0
    %v391 = vmax.f32 %v357, 0.0
    %v392 = vmax.f32 %v359, 0.0
    %v393 = vmax.f32 %v363, 0.0
    %v394 = vmax.f32 %v365, 0.0
    %v395 = vmax.f32 %v369, 0.0
    %v396 = vmax.f32 %v371, 0.0
    %v397 = vmax.f32 %v375, 0.0
    %v398 = vmax.f32 %v377, 0.0
    %v399 = vmax.f32 %v381, 0.0
    %v400 = vmax.f32 %v383, 0.0
    %402 = vset.pattern.permute.xlu0 0
    %403 = vperm.xlu0 %402, %v65
    %v404 = vpop.permute.xlu0 %403
    %407 = vset.pattern.permute.xlu0 0
    %408 = vperm.xlu0 %407, %v66
    %v409 = vpop.permute.xlu0 %408
    %412 = vset.pattern.permute.xlu0 0
    %413 = vperm.xlu0 %412, %v67
    %v414 = vpop.permute.xlu0 %413
    %417 = vset.pattern.permute.xlu0 0
    %418 = vperm.xlu0 %417, %v68
    %v419 = vpop.permute.xlu0 %418
    %vm421 = vcmask 523264
    %v423 = vsel %vm421, %v61, 0
    %v426 = vsel %vm421, %v62, 0
    %v429 = vsel %vm421, %v63, 0
    %v432 = vsel %vm421, %v64, 0
    %434 = vmatprep.subr.mxu0 %v386
    %435 = vmatpush1.msra.mxu0 %v385
    %436 = vmatprep.subr.mxu0 %v388
    %437 = vmatpush1.msra.mxu0 %v387
    %438 = vmatprep.subr.mxu0 %v390
    %439 = vmatpush1.msra.mxu0 %v389
    %440 = vmatprep.subr.mxu0 %v392
    %441 = vmatpush1.msra.mxu0 %v391
    %442 = vmatprep.subr.mxu0 %v394
    %443 = vmatpush1.msra.mxu0 %v393
    %444 = vmatprep.subr.mxu0 %v396
    %445 = vmatpush1.msra.mxu0 %v395
    %446 = vmatprep.subr.mxu0 %v398
    %447 = vmatpush1.msra.mxu0 %v397
    %448 = vmatprep.subr.mxu0 %v400
    %449 = vmatpush1.msra.mxu0 %v399
    %450 = vmatprep.subr.mxu0 0.0
    %451 = vmatpush1.msra.mxu0 0.0
    %452 = vmatprep.subr.mxu0 0.0
    %453 = vmatpush1.msra.mxu0 0.0
    %454 = vmatprep.subr.mxu0 0.0
    %455 = vmatpush1.msra.mxu0 0.0
    %456 = vmatprep.subr.mxu0 0.0
    %457 = vmatpush1.msra.mxu0 0.0
    %458 = vmatprep.subr.mxu0 0.0
    %459 = vmatpush1.msra.mxu0 0.0
    %460 = vmatprep.subr.mxu0 0.0
    %461 = vmatpush1.msra.mxu0 0.0
    %462 = vmatprep.subr.mxu0 0.0
    %463 = vmatpush1.msra.mxu0 0.0
    %464 = vmatprep.subr.mxu0 0.0
    %465 = vmatpush1.msra.mxu0 0.0
    %466 = vmatprep.subr.mxu0 0.0
    %467 = vmatpush1.msra.mxu0 0.0
    %468 = vmatprep.subr.mxu0 0.0
    %469 = vmatpush1.msra.mxu0 0.0
    %470 = vmatprep.subr.mxu0 0.0
    %471 = vmatpush1.msra.mxu0 0.0
    %472 = vmatprep.subr.mxu0 0.0
    %473 = vmatpush1.msra.mxu0 0.0
    %474 = vmatprep.subr.mxu0 0.0
    %475 = vmatpush1.msra.mxu0 0.0
    %476 = vmatprep.subr.mxu0 0.0
    %477 = vmatpush1.msra.mxu0 0.0
    %478 = vmatprep.subr.mxu0 0.0
    %479 = vmatpush1.msra.mxu0 0.0
    %480 = vmatprep.subr.mxu0 0.0
    %481 = vmatpush1.msra.mxu0 0.0
    %482 = vmatprep.subr.mxu0 0.0
    %483 = vmatpush1.msra.mxu0 0.0
    %484 = vmatprep.subr.mxu0 0.0
    %485 = vmatpush1.msra.mxu0 0.0
    %486 = vmatprep.subr.mxu0 0.0
    %487 = vmatpush1.msra.mxu0 0.0
    %488 = vmatprep.subr.mxu0 0.0
    %489 = vmatpush1.msra.mxu0 0.0
    %490 = vmatprep.subr.mxu0 0.0
    %491 = vmatpush1.msra.mxu0 0.0
    %492 = vmatprep.subr.mxu0 0.0
    %493 = vmatpush1.msra.mxu0 0.0
    %494 = vmatprep.subr.mxu0 0.0
    %495 = vmatpush1.msra.mxu0 0.0
    %496 = vmatprep.subr.mxu0 0.0
    %497 = vmatpush1.msra.mxu0 0.0
    %498 = vmatprep.mubr.f32.mxu0 0.0
    %499 = vmatmul.mubr.f32.gmra.mrb[0].mxu0 %v423
    %v500 = vpop.f32.mrb[0].mxu0
    %v501 = vadd.f32 %v404, %v500
    %v502 = vpop.f32.mrb[0].mxu0
    %v503 = vadd.f32 %v404, %v502
    %504 = vmatprep.mubr.f32.mxu0 0.0
    %505 = vmatmul.mubr.f32.gmra.mrb[0].mxu0 %v426
    %v506 = vpop.f32.mrb[0].mxu0
    %v507 = vadd.f32 %v409, %v506
    %v508 = vpop.f32.mrb[0].mxu0
    %v509 = vadd.f32 %v409, %v508
    %510 = vmatprep.mubr.f32.mxu0 0.0
    %511 = vmatmul.mubr.f32.gmra.mrb[0].mxu0 %v429
    %v512 = vpop.f32.mrb[0].mxu0
    %v513 = vadd.f32 %v414, %v512
    %v514 = vpop.f32.mrb[0].mxu0
    %v515 = vadd.f32 %v414, %v514
    %516 = vmatprep.mubr.f32.mxu0 0.0
    %517 = vmatmul.mubr.f32.gmra.mrb[0].mxu0 %v432
    %v518 = vpop.f32.mrb[0].mxu0
    %v519 = vadd.f32 %v419, %v518
    %v520 = vpop.f32.mrb[0].mxu0
    %v521 = vadd.f32 %v419, %v520
    %522 = vdwg.mxu0
    %v523 = vmax.f32 %v501, 0.0
    %v524 = vmax.f32 %v503, 0.0
    %v525 = vmax.f32 %v507, 0.0
    %v526 = vmax.f32 %v509, 0.0
    %v527 = vmax.f32 %v513, 0.0
    %v528 = vmax.f32 %v515, 0.0
    %v529 = vmax.f32 %v519, 0.0
    %v530 = vmax.f32 %v521, 0.0
    %532 = vset.pattern.permute.xlu0 0
    %533 = vperm.xlu0 %532, %v71
    %v534 = vpop.permute.xlu0 %533
    %537 = vset.pattern.permute.xlu0 0
    %538 = vperm.xlu0 %537, %v72
    %v539 = vpop.permute.xlu0 %538
    %vm541 = vcmask 261120
    %v543 = vsel %vm541, %v69, 0
    %v546 = vsel %vm541, %v70, 0
    %548 = vmatprep.subr.mxu0 %v524
    %549 = vmatpush1.msra.mxu0 %v523
    %550 = vmatprep.subr.mxu0 %v526
    %551 = vmatpush1.msra.mxu0 %v525
    %552 = vmatprep.subr.mxu0 %v528
    %553 = vmatpush1.msra.mxu0 %v527
    %554 = vmatprep.subr.mxu0 %v530
    %555 = vmatpush1.msra.mxu0 %v529
    %556 = vmatprep.subr.mxu0 0.0
    %557 = vmatpush1.msra.mxu0 0.0
    %558 = vmatprep.subr.mxu0 0.0
    %559 = vmatpush1.msra.mxu0 0.0
    %560 = vmatprep.subr.mxu0 0.0
    %561 = vmatpush1.msra.mxu0 0.0
    %562 = vmatprep.subr.mxu0 0.0
    %563 = vmatpush1.msra.mxu0 0.0
    %564 = vmatprep.subr.mxu0 0.0
    %565 = vmatpush1.msra.mxu0 0.0
    %566 = vmatprep.subr.mxu0 0.0
    %567 = vmatpush1.msra.mxu0 0.0
    %568 = vmatprep.subr.mxu0 0.0
    %569 = vmatpush1.msra.mxu0 0.0
    %570 = vmatprep.subr.mxu0 0.0
    %571 = vmatpush1.msra.mxu0 0.0
    %572 = vmatprep.subr.mxu0 0.0
    %573 = vmatpush1.msra.mxu0 0.0
    %574 = vmatprep.subr.mxu0 0.0
    %575 = vmatpush1.msra.mxu0 0.0
    %576 = vmatprep.subr.mxu0 0.0
    %577 = vmatpush1.msra.mxu0 0.0
    %578 = vmatprep.subr.mxu0 0.0
    %579 = vmatpush1.msra.mxu0 0.0
    %580 = vmatprep.subr.mxu0 0.0
    %581 = vmatpush1.msra.mxu0 0.0
    %582 = vmatprep.subr.mxu0 0.0
    %583 = vmatpush1.msra.mxu0 0.0
    %584 = vmatprep.subr.mxu0 0.0
    %585 = vmatpush1.msra.mxu0 0.0
    %586 = vmatprep.subr.mxu0 0.0
    %587 = vmatpush1.msra.mxu0 0.0
    %588 = vmatprep.subr.mxu0 0.0
    %589 = vmatpush1.msra.mxu0 0.0
    %590 = vmatprep.subr.mxu0 0.0
    %591 = vmatpush1.msra.mxu0 0.0
    %592 = vmatprep.subr.mxu0 0.0
    %593 = vmatpush1.msra.mxu0 0.0
    %594 = vmatprep.subr.mxu0 0.0
    %595 = vmatpush1.msra.mxu0 0.0
    %596 = vmatprep.subr.mxu0 0.0
    %597 = vmatpush1.msra.mxu0 0.0
    %598 = vmatprep.subr.mxu0 0.0
    %599 = vmatpush1.msra.mxu0 0.0
    %600 = vmatprep.subr.mxu0 0.0
    %601 = vmatpush1.msra.mxu0 0.0
    %602 = vmatprep.subr.mxu0 0.0
    %603 = vmatpush1.msra.mxu0 0.0
    %604 = vmatprep.subr.mxu0 0.0
    %605 = vmatpush1.msra.mxu0 0.0
    %606 = vmatprep.subr.mxu0 0.0
    %607 = vmatpush1.msra.mxu0 0.0
    %608 = vmatprep.subr.mxu0 0.0
    %609 = vmatpush1.msra.mxu0 0.0
    %610 = vmatprep.subr.mxu0 0.0
    %611 = vmatpush1.msra.mxu0 0.0
    %612 = vmatprep.mubr.f32.mxu0 0.0
    %613 = vmatmul.mubr.f32.gmra.mrb[0].mxu0 %v543
    %v614 = vpop.f32.mrb[0].mxu0
    %v615 = vadd.f32 %v534, %v614
    %v616 = vpop.f32.mrb[0].mxu0
    %v617 = vadd.f32 %v534, %v616
    %618 = vmatprep.mubr.f32.mxu0 0.0
    %619 = vmatmul.mubr.f32.gmra.mrb[0].mxu0 %v546
    %v620 = vpop.f32.mrb[0].mxu0
    %v621 = vadd.f32 %v539, %v620
    %v622 = vpop.f32.mrb[0].mxu0
    %v623 = vadd.f32 %v539, %v622
    %624 = vdwg.mxu0
    %v625 = vmax.f32 %v615, 0.0
    %v626 = vmax.f32 %v617, 0.0
    %v627 = vmax.f32 %v621, 0.0
    %v628 = vmax.f32 %v623, 0.0
    %630 = vset.pattern.permute.xlu0 0
    %631 = vperm.xlu0 %630, %v74
    %v632 = vpop.permute.xlu0 %631
    %v635 = vsel %vm151, %v73, 0
    %637 = vmatprep.subr.mxu0 %v626
    %638 = vmatpush1.msra.mxu0 %v625
    %639 = vmatprep.subr.mxu0 %v628
    %640 = vmatpush1.msra.mxu0 %v627
    %641 = vmatprep.subr.mxu0 0.0
    %642 = vmatpush1.msra.mxu0 0.0
    %643 = vmatprep.subr.mxu0 0.0
    %644 = vmatpush1.msra.mxu0 0.0
    %645 = vmatprep.subr.mxu0 0.0
    %646 = vmatpush1.msra.mxu0 0.0
    %647 = vmatprep.subr.mxu0 0.0
    %648 = vmatpush1.msra.mxu0 0.0
    %649 = vmatprep.subr.mxu0 0.0
    %650 = vmatpush1.msra.mxu0 0.0
    %651 = vmatprep.subr.mxu0 0.0
    %652 = vmatpush1.msra.mxu0 0.0
    %653 = vmatprep.subr.mxu0 0.0
    %654 = vmatpush1.msra.mxu0 0.0
    %655 = vmatprep.subr.mxu0 0.0
    %656 = vmatpush1.msra.mxu0 0.0
    %657 = vmatprep.subr.mxu0 0.0
    %658 = vmatpush1.msra.mxu0 0.0
    %659 = vmatprep.subr.mxu0 0.0
    %660 = vmatpush1.msra.mxu0 0.0
    %661 = vmatprep.subr.mxu0 0.0
    %662 = vmatpush1.msra.mxu0 0.0
    %663 = vmatprep.subr.mxu0 0.0
    %664 = vmatpush1.msra.mxu0 0.0
    %665 = vmatprep.subr.mxu0 0.0
    %666 = vmatpush1.msra.mxu0 0.0
    %667 = vmatprep.subr.mxu0 0.0
    %668 = vmatpush1.msra.mxu0 0.0
    %669 = vmatprep.subr.mxu0 0.0
    %670 = vmatpush1.msra.mxu0 0.0
    %671 = vmatprep.subr.mxu0 0.0
    %672 = vmatpush1.msra.mxu0 0.0
    %673 = vmatprep.subr.mxu0 0.0
    %674 = vmatpush1.msra.mxu0 0.0
    %675 = vmatprep.subr.mxu0 0.0
    %676 = vmatpush1.msra.mxu0 0.0
    %677 = vmatprep.subr.mxu0 0.0
    %678 = vmatpush1.msra.mxu0 0.0
    %679 = vmatprep.subr.mxu0 0.0
    %680 = vmatpush1.msra.mxu0 0.0
    %681 = vmatprep.subr.mxu0 0.0
    %682 = vmatpush1.msra.mxu0 0.0
    %683 = vmatprep.subr.mxu0 0.0
    %684 = vmatpush1.msra.mxu0 0.0
    %685 = vmatprep.subr.mxu0 0.0
    %686 = vmatpush1.msra.mxu0 0.0
    %687 = vmatprep.subr.mxu0 0.0
    %688 = vmatpush1.msra.mxu0 0.0
    %689 = vmatprep.subr.mxu0 0.0
    %690 = vmatpush1.msra.mxu0 0.0
    %691 = vmatprep.subr.mxu0 0.0
    %692 = vmatpush1.msra.mxu0 0.0
    %693 = vmatprep.subr.mxu0 0.0
    %694 = vmatpush1.msra.mxu0 0.0
    %695 = vmatprep.subr.mxu0 0.0
    %696 = vmatpush1.msra.mxu0 0.0
    %697 = vmatprep.subr.mxu0 0.0
    %698 = vmatpush1.msra.mxu0 0.0
    %699 = vmatprep.subr.mxu0 0.0
    %700 = vmatpush1.msra.mxu0 0.0
    %701 = vmatprep.mubr.f32.mxu0 0.0
    %702 = vmatmul.mubr.f32.gmra.mrb[0].mxu0 %v635
    %v703 = vpop.f32.mrb[0].mxu0
    %v704 = vadd.f32 %v632, %v703
    %v705 = vpop.f32.mrb[0].mxu0
    %v706 = vadd.f32 %v632, %v705
    %707 = vdwg.mxu0
    %v708 = vmax.f32 %v704, 0.0
    %v709 = vmax.f32 %v706, 0.0
    %711 = vset.pattern.permute.xlu0 0
    %712 = vperm.xlu0 %711, %v76
    %v713 = vpop.permute.xlu0 %712
    %vm715 = vcmask 64512
    %v717 = vsel %vm715, %v75, 0
    %719 = vmatprep.subr.mxu0 %v709
    %720 = vmatpush1.msra.mxu0 %v708
    %721 = vmatprep.subr.mxu0 0.0
    %722 = vmatpush1.msra.mxu0 0.0
    %723 = vmatprep.subr.mxu0 0.0
    %724 = vmatpush1.msra.mxu0 0.0
    %725 = vmatprep.subr.mxu0 0.0
    %726 = vmatpush1.msra.mxu0 0.0
    %727 = vmatprep.subr.mxu0 0.0
    %728 = vmatpush1.msra.mxu0 0.0
    %729 = vmatprep.subr.mxu0 0.0
    %730 = vmatpush1.msra.mxu0 0.0
    %731 = vmatprep.subr.mxu0 0.0
    %732 = vmatpush1.msra.mxu0 0.0
    %733 = vmatprep.subr.mxu0 0.0
    %734 = vmatpush1.msra.mxu0 0.0
    %735 = vmatprep.subr.mxu0 0.0
    %736 = vmatpush1.msra.mxu0 0.0
    %737 = vmatprep.subr.mxu0 0.0
    %738 = vmatpush1.msra.mxu0 0.0
    %739 = vmatprep.subr.mxu0 0.0
    %740 = vmatpush1.msra.mxu0 0.0
    %741 = vmatprep.subr.mxu0 0.0
    %742 = vmatpush1.msra.mxu0 0.0
    %743 = vmatprep.subr.mxu0 0.0
    %744 = vmatpush1.msra.mxu0 0.0
    %745 = vmatprep.subr.mxu0 0.0
    %746 = vmatpush1.msra.mxu0 0.0
    %747 = vmatprep.subr.mxu0 0.0
    %748 = vmatpush1.msra.mxu0 0.0
    %749 = vmatprep.subr.mxu0 0.0
    %750 = vmatpush1.msra.mxu0 0.0
    %751 = vmatprep.subr.mxu0 0.0
    %752 = vmatpush1.msra.mxu0 0.0
    %753 = vmatprep.subr.mxu0 0.0
    %754 = vmatpush1.msra.mxu0 0.0
    %755 = vmatprep.subr.mxu0 0.0
    %756 = vmatpush1.msra.mxu0 0.0
    %757 = vmatprep.subr.mxu0 0.0
    %758 = vmatpush1.msra.mxu0 0.0
    %759 = vmatprep.subr.mxu0 0.0
    %760 = vmatpush1.msra.mxu0 0.0
    %761 = vmatprep.subr.mxu0 0.0
    %762 = vmatpush1.msra.mxu0 0.0
    %763 = vmatprep.subr.mxu0 0.0
    %764 = vmatpush1.msra.mxu0 0.0
    %765 = vmatprep.subr.mxu0 0.0
    %766 = vmatpush1.msra.mxu0 0.0
    %767 = vmatprep.subr.mxu0 0.0
    %768 = vmatpush1.msra.mxu0 0.0
    %769 = vmatprep.subr.mxu0 0.0
    %770 = vmatpush1.msra.mxu0 0.0
    %771 = vmatprep.subr.mxu0 0.0
    %772 = vmatpush1.msra.mxu0 0.0
    %773 = vmatprep.subr.mxu0 0.0
    %774 = vmatpush1.msra.mxu0 0.0
    %775 = vmatprep.subr.mxu0 0.0
    %776 = vmatpush1.msra.mxu0 0.0
    %777 = vmatprep.subr.mxu0 0.0
    %778 = vmatpush1.msra.mxu0 0.0
    %779 = vmatprep.subr.mxu0 0.0
    %780 = vmatpush1.msra.mxu0 0.0
    %781 = vmatprep.subr.mxu0 0.0
    %782 = vmatpush1.msra.mxu0 0.0
    %783 = vmatprep.mubr.f32.mxu0 0.0
    %784 = vmatmul.mubr.f32.gmra.mrb[0].mxu0 %v717
    %v785 = vpop.f32.mrb[0].mxu0
    %v786 = vadd.f32 %v713, %v785
    %v787 = vpop.f32.mrb[0].mxu0
    %v788 = vadd.f32 %v713, %v787
    %789 = vdwg.mxu0
    %v790 = vmax.f32 %v786, 0.0
    %v791 = vmax.f32 %v788, 0.0
    %793 = vset.pattern.permute.xlu0 0
    %794 = vperm.xlu0 %793, %v78
    %v795 = vpop.permute.xlu0 %794
    %vm797 = vcmask 31744
    %v799 = vsel %vm797, %v77, 0
    %vm801 = vcmask 1043456
    %v803 = vsel %vm801, %v790, 0
    %v806 = vsel %vm801, %v791, 0
    %808 = vmatprep.subr.mxu0 %v806
    %809 = vmatpush1.msra.mxu0 %v803
    %810 = vmatprep.subr.mxu0 0.0
    %811 = vmatpush1.msra.mxu0 0.0
    %812 = vmatprep.subr.mxu0 0.0
    %813 = vmatpush1.msra.mxu0 0.0
    %814 = vmatprep.subr.mxu0 0.0
    %815 = vmatpush1.msra.mxu0 0.0
    %816 = vmatprep.subr.mxu0 0.0
    %817 = vmatpush1.msra.mxu0 0.0
    %818 = vmatprep.subr.mxu0 0.0
    %819 = vmatpush1.msra.mxu0 0.0
    %820 = vmatprep.subr.mxu0 0.0
    %821 = vmatpush1.msra.mxu0 0.0
    %822 = vmatprep.subr.mxu0 0.0
    %823 = vmatpush1.msra.mxu0 0.0
    %824 = vmatprep.subr.mxu0 0.0
    %825 = vmatpush1.msra.mxu0 0.0
    %826 = vmatprep.subr.mxu0 0.0
    %827 = vmatpush1.msra.mxu0 0.0
    %828 = vmatprep.subr.mxu0 0.0
    %829 = vmatpush1.msra.mxu0 0.0
    %830 = vmatprep.subr.mxu0 0.0
    %831 = vmatpush1.msra.mxu0 0.0
    %832 = vmatprep.subr.mxu0 0.0
    %833 = vmatpush1.msra.mxu0 0.0
    %834 = vmatprep.subr.mxu0 0.0
    %835 = vmatpush1.msra.mxu0 0.0
    %836 = vmatprep.subr.mxu0 0.0
    %837 = vmatpush1.msra.mxu0 0.0
    %838 = vmatprep.subr.mxu0 0.0
    %839 = vmatpush1.msra.mxu0 0.0
    %840 = vmatprep.subr.mxu0 0.0
    %841 = vmatpush1.msra.mxu0 0.0
    %842 = vmatprep.subr.mxu0 0.0
    %843 = vmatpush1.msra.mxu0 0.0
    %844 = vmatprep.subr.mxu0 0.0
    %845 = vmatpush1.msra.mxu0 0.0
    %846 = vmatprep.subr.mxu0 0.0
    %847 = vmatpush1.msra.mxu0 0.0
    %848 = vmatprep.subr.mxu0 0.0
    %849 = vmatpush1.msra.mxu0 0.0
    %850 = vmatprep.subr.mxu0 0.0
    %851 = vmatpush1.msra.mxu0 0.0
    %852 = vmatprep.subr.mxu0 0.0
    %853 = vmatpush1.msra.mxu0 0.0
    %854 = vmatprep.subr.mxu0 0.0
    %855 = vmatpush1.msra.mxu0 0.0
    %856 = vmatprep.subr.mxu0 0.0
    %857 = vmatpush1.msra.mxu0 0.0
    %858 = vmatprep.subr.mxu0 0.0
    %859 = vmatpush1.msra.mxu0 0.0
    %860 = vmatprep.subr.mxu0 0.0
    %861 = vmatpush1.msra.mxu0 0.0
    %862 = vmatprep.subr.mxu0 0.0
    %863 = vmatpush1.msra.mxu0 0.0
    %864 = vmatprep.subr.mxu0 0.0
    %865 = vmatpush1.msra.mxu0 0.0
    %866 = vmatprep.subr.mxu0 0.0
    %867 = vmatpush1.msra.mxu0 0.0
    %868 = vmatprep.subr.mxu0 0.0
    %869 = vmatpush1.msra.mxu0 0.0
    %870 = vmatprep.subr.mxu0 0.0
    %871 = vmatpush1.msra.mxu0 0.0
    %872 = vmatprep.mubr.f32.mxu0 0.0
    %873 = vmatmul.mubr.f32.gmra.mrb[0].mxu0 %v799
    %v874 = vpop.f32.mrb[0].mxu0
    %v875 = vadd.f32 %v795, %v874
    %v876 = vpop.f32.mrb[0].mxu0
    %v877 = vadd.f32 %v795, %v876
    %878 = vdwg.mxu0
    %v881 = vcombine.low %v875, %v877
    %v883 = vunpack.c.l.s4 1983009808
    %v884 = vunpack.c.0.s8 %v883
    %v885 = vlaneseq
    %v886 = vshrl.u32 %v885, 7
    %v887 = vsub.s32 %v884, %v886
    %v888 = vrot.slane %v881, %v887
    %890 = vst [vmem:[#allocation2] sm:$0xf] %v888
    // Predicated region
    $region54: #{banknet_forward.1} parent=1 // pred_check
      _
    $region55: #{banknet_forward.1} parent=1 // pred_check_branch
      %892 = sbr.rel (0) target = $region57
    $region56: #{banknet_forward.1} parent=1 // pred_region
      %s894 = ssub.s32 64, 64
      %895 = vsyncadd [#allocation3], %s894
      %s897 = sshll.u32 [#allocation2], 4
      %s898 = int_to_ptr.vmem [resolvable:$true] %s897
      %900 = dma.vmem_to_hbm [thread:$0]  %s898, 64, %s13, [#allocation3]
    $region57: #{banknet_forward.1} parent=1 // pred_fallthru
      _
    // Predicated region
    $region58: #{banknet_forward.1} parent=1 // pred_check
      _
    $region59: #{banknet_forward.1} parent=1 // pred_check_branch
      %902 = sbr.rel (0) target = $region61
    $region60: #{banknet_forward.1} parent=1 // pred_region
      %903 = dma.done [#allocation3], 64
    $region61: #{banknet_forward.1} parent=1 // pred_fallthru
      _
    %904 = vsyncpa [#allocation3], 1

</llo_original>
